<compile_context>
chip_gen: v6e
topology: v6e:2x2x1
jax: 0.10.0
libtpu: 0.0.40
codegen_flags: <defaults>
</compile_context>

<pallas_src>
import math

import jax
import jax.numpy as jnp
from jax import lax
from jax.experimental import pallas as pl
from jax.experimental.pallas import tpu as pltpu

NEG_MASK_VALUE = -10000.0  # matches the PyTorch module's masked_fill_ value


def _flash_attention_kernel(q_ref, k_ref, v_ref, o_ref, m_sc, l_sc, acc_sc):
    """One (batch*head, q_tile, kv_tile) step of causal flash attention.

    q_ref:   (q_tile, head_dim)      current query tile (VMEM)
    k_ref:   (kv_tile, head_dim)     current key tile   (VMEM)
    v_ref:   (kv_tile, head_dim)     current value tile (VMEM)
    o_ref:   (q_tile, head_dim)      output tile (written at the last kv step)
    m_sc:    (q_tile, 1)  f32        running row max
    l_sc:    (q_tile, 1)  f32        running softmax denominator
    acc_sc:  (q_tile, head_dim) f32  running (unnormalized) output accumulator
    """
    q_idx = pl.program_id(1)
    kv_idx = pl.program_id(2)
    num_kv = pl.num_programs(2)

    q_tile, head_dim = q_ref.shape
    kv_tile = k_ref.shape[0]
    scale = 1.0 / math.sqrt(head_dim)

    q_start = q_idx * q_tile
    kv_start = kv_idx * kv_tile
    q_end = q_start + (q_tile - 1)      # last query row of this tile
    kv_end = kv_start + (kv_tile - 1)   # last key column of this tile

    # ---- init online-softmax state at the first kv step ---------------------
    @pl.when(kv_idx == 0)
    def _init():
        m_sc[...] = jnp.full(m_sc.shape, -jnp.inf, dtype=jnp.float32)
        l_sc[...] = jnp.zeros(l_sc.shape, dtype=jnp.float32)
        acc_sc[...] = jnp.zeros(acc_sc.shape, dtype=jnp.float32)

    def _attend(apply_mask):
        # Scale folded into Q: q_tile*head_dim multiplies instead of q_tile*kv_tile.
        q = q_ref[...] * scale
        # QK^T without materializing K^T: contract head_dim of both operands.
        s = lax.dot_general(
            q, k_ref[...],
            dimension_numbers=(((1,), (1,)), ((), ())),
            preferred_element_type=jnp.float32)          # (q_tile, kv_tile), f32
        if apply_mask:  # only emitted for tiles that straddle the causal diagonal
            row = lax.broadcasted_iota(jnp.int32, s.shape, 0) + q_start
            col = lax.broadcasted_iota(jnp.int32, s.shape, 1) + kv_start
            s = jnp.where(col > row, jnp.float32(NEG_MASK_VALUE), s)

        m_prev = m_sc[...]
        m_new = jnp.maximum(m_prev, jnp.max(s, axis=-1, keepdims=True))
        alpha = jnp.exp(m_prev - m_new)
        p = jnp.exp(s - m_new)
        l_sc[...] = alpha * l_sc[...] + jnp.sum(p, axis=-1, keepdims=True)
        acc_sc[...] = alpha * acc_sc[...] + lax.dot_general(
            p.astype(v_ref.dtype), v_ref[...],
            dimension_numbers=(((1,), (0,)), ((), ())),
            preferred_element_type=jnp.float32)
        m_sc[...] = m_new

    # ---- causal block schedule ----------------------------------------------
    # Tiles strictly above the diagonal (kv_start > q_end) are skipped entirely
    # (~2x less MXU / exp work). Fully-below-diagonal tiles skip the mask VPU
    # pass; only diagonal-straddling tiles pay for iota/compare/select.
    @pl.when(kv_end <= q_start)                                       # fully unmasked
    def _no_mask():
        _attend(apply_mask=False)

    @pl.when(jnp.logical_and(kv_start <= q_end, kv_end > q_start))    # diagonal tile
    def _with_mask():
        _attend(apply_mask=True)

    # ---- finalize: normalize and write the output tile -----------------------
    @pl.when(kv_idx == num_kv - 1)
    def _finalize():
        # Exact reciprocal: runs once per q tile (q_tile elements), negligible cost,
        # and keeps numerics tight vs. the reference softmax.
        inv_l = pl.reciprocal(l_sc[...], approx=False)
        o_ref[...] = (acc_sc[...] * inv_l).astype(o_ref.dtype)


def _pick_tile(n, preferred):
    """Largest tile <= preferred that divides n and is sublane-aligned (mult of 8)."""
    if n <= preferred:
        return n
    for t in range(preferred, 7, -1):
        if n % t == 0 and t % 8 == 0:
            return t
    return n  # awkward length: fall back to the whole axis (legal full-dim block)


def core_attention(query_states, key_states, value_states, *,
                   q_tile=256, kv_tile=512,
                   vmem_limit_bytes=32 * 1024 * 1024):
    """Causal attention matching PyTorch CoreAttention.forward semantics.

    query_states: (bsz, num_heads, q_len, head_dim)
    key_states  : (bsz, num_heads, kv_len, head_dim)
    value_states: (bsz, num_heads, kv_len, head_dim)
    returns     : (bsz, num_heads, q_len, head_dim) in query_states.dtype
    """
    bsz, num_heads, q_len, head_dim = query_states.shape
    kv_len = key_states.shape[-2]
    bh = bsz * num_heads

    q_tile = _pick_tile(q_len, q_tile)
    kv_tile = _pick_tile(kv_len, kv_tile)
    num_q = q_len // q_tile
    num_kv = kv_len // kv_tile

    q = query_states.reshape(bh, q_len, head_dim)
    k = key_states.reshape(bh, kv_len, head_dim)
    v = value_states.reshape(bh, kv_len, head_dim)

    itemsize = jnp.dtype(query_states.dtype).itemsize
    cost = pl.CostEstimate(
        flops=4 * bh * q_len * kv_len * head_dim,      # QK^T + PV
        transcendentals=bh * q_len * kv_len,           # softmax exp
        bytes_accessed=(2 * q.size + k.size + v.size) * itemsize,
    )

    out = pl.pallas_call(
        _flash_attention_kernel,
        out_shape=jax.ShapeDtypeStruct((bh, q_len, head_dim), query_states.dtype),
        grid_spec=pltpu.PrefetchScalarGridSpec(
            num_scalar_prefetch=0,
            grid=(bh, num_q, num_kv),
            in_specs=[
                pl.BlockSpec((pl.Squeezed(), q_tile, head_dim),
                             lambda b, qi, ki: (b, qi, 0)),
                pl.BlockSpec((pl.Squeezed(), kv_tile, head_dim),
                             lambda b, qi, ki: (b, ki, 0)),
                pl.BlockSpec((pl.Squeezed(), kv_tile, head_dim),
                             lambda b, qi, ki: (b, ki, 0)),
            ],
            out_specs=pl.BlockSpec((pl.Squeezed(), q_tile, head_dim),
                                   lambda b, qi, ki: (b, qi, 0)),
            scratch_shapes=[
                pltpu.VMEM((q_tile, 1), jnp.float32),         # m (running max)
                pltpu.VMEM((q_tile, 1), jnp.float32),         # l (running denom)
                pltpu.VMEM((q_tile, head_dim), jnp.float32),  # acc
            ],
        ),
        compiler_params=pltpu.CompilerParams(
            dimension_semantics=("parallel", "parallel", "arbitrary"),
            vmem_limit_bytes=vmem_limit_bytes,
        ),
        cost_estimate=cost,
    )(q, k, v)

    return out.reshape(bsz, num_heads, q_len, head_dim)


def _reference(query_states, key_states, value_states):
    # Pure-JAX reference of the PyTorch forward pass.
    head_dim = query_states.shape[-1]
    q_len = query_states.shape[-2]
    kv_len = key_states.shape[-2]
    s = jnp.einsum("bhqd,bhkd->bhqk", query_states, key_states) / math.sqrt(head_dim)
    mask = jnp.triu(jnp.ones((1, 1, q_len, kv_len), dtype=bool), k=1)
    s = jnp.where(mask, NEG_MASK_VALUE, s)
    p = jax.nn.softmax(s.astype(jnp.float32), axis=-1).astype(query_states.dtype)
    return jnp.einsum("bhqk,bhkd->bhqd", p, value_states)


if __name__ == "__main__":
    # TODO(synk): the XLA_DOWNCAST_BF16 env branch (float64 softmax) has no TPU
    # equivalent; the float32-softmax path is implemented.

    # Case 1: small shapes matching the module layout (bsz=2, heads=4, seq=8, d=32).
    bsz, num_heads, q_len, head_dim = 2, 4, 8, 32
    kq, kk, kv = jax.random.split(jax.random.PRNGKey(0), 3)
    q1 = jax.random.normal(kq, (bsz, num_heads, q_len, head_dim), dtype=jnp.float32)
    k1 = jax.random.normal(kk, (bsz, num_heads, q_len, head_dim), dtype=jnp.float32)
    v1 = jax.random.normal(kv, (bsz, num_heads, q_len, head_dim), dtype=jnp.float32)
    out1 = core_attention(q1, k1, v1)
    jax.block_until_ready(out1)
    ref1 = _reference(q1, k1, v1)
    assert out1.shape == (bsz, num_heads, q_len, head_dim)
    assert jnp.allclose(out1, ref1, atol=1e-4, rtol=1e-4), "mismatch vs reference (case 1)"

    # Case 2: exercises the multi-tile flash path and causal block skipping.
    bsz2, heads2, seq2, hd2 = 1, 2, 128, 32
    kq2, kk2, kv2 = jax.random.split(jax.random.PRNGKey(1), 3)
    q2 = jax.random.normal(kq2, (bsz2, heads2, seq2, hd2), dtype=jnp.float32)
    k2 = jax.random.normal(kk2, (bsz2, heads2, seq2, hd2), dtype=jnp.float32)
    v2 = jax.random.normal(kv2, (bsz2, heads2, seq2, hd2), dtype=jnp.float32)
    out2 = core_attention(q2, k2, v2, q_tile=32, kv_tile=64)
    jax.block_until_ready(out2)
    ref2 = _reference(q2, k2, v2)
    assert jnp.allclose(out2, ref2, atol=1e-4, rtol=1e-4), "mismatch vs reference (case 2)"

    print("KERNEL_OK")
</pallas_src>

<mosaic_0001>
module attributes {stable_mosaic.version = 11 : i64} {
  func.func @_flash_attention_kernel(%arg0: i32, %arg1: i32, %arg2: i32, %arg3: memref<1x8x32xf32, #tpu.memory_space<vmem>>, %arg4: memref<1x8x32xf32, #tpu.memory_space<vmem>>, %arg5: memref<1x8x32xf32, #tpu.memory_space<vmem>>, %arg6: memref<1x8x32xf32, #tpu.memory_space<vmem>>, %arg7: memref<8x1xf32, #tpu.memory_space<vmem>>, %arg8: memref<8x1xf32, #tpu.memory_space<vmem>>, %arg9: memref<8x32xf32, #tpu.memory_space<vmem>>) attributes {dimension_semantics = [#tpu.dimension_semantics<parallel>, #tpu.dimension_semantics<parallel>, #tpu.dimension_semantics<arbitrary>], iteration_bounds = array<i64: 8, 1, 1>, scalar_prefetch = 0 : i64, scratch_operands = 3 : i64, tpu.core_type = #tpu.core_type<tc>, window_params = [{transform_indices = @transform_0, window_bounds = array<i64: 1, 8, 32>}, {transform_indices = @transform_1, window_bounds = array<i64: 1, 8, 32>}, {transform_indices = @transform_2, window_bounds = array<i64: 1, 8, 32>}, {transform_indices = @transform_3, window_bounds = array<i64: 1, 8, 32>}]} {
    %c8_i32 = arith.constant 8 : i32
    %0 = arith.muli %arg1, %c8_i32 : i32
    %c8_i32_0 = arith.constant 8 : i32
    %1 = arith.muli %arg2, %c8_i32_0 : i32
    %c7_i32 = arith.constant 7 : i32
    %2 = arith.addi %0, %c7_i32 : i32
    %c7_i32_1 = arith.constant 7 : i32
    %3 = arith.addi %1, %c7_i32_1 : i32
    %c0_i32 = arith.constant 0 : i32
    %4 = arith.cmpi eq, %arg2, %c0_i32 : i32
    %5 = arith.extui %4 : i1 to i32
    %c0_i32_2 = arith.constant 0 : i32
    %6 = arith.cmpi ne, %5, %c0_i32_2 : i32
    scf.if %6 {
      %cst = arith.constant 0xFF800000 : f32
      %18 = vector.broadcast %cst : f32 to vector<8x1xf32>
      %c0 = arith.constant 0 : index
      %c0_7 = arith.constant 0 : index
      %19 = vector.load %arg7[%c0, %c0_7] : memref<8x1xf32, #tpu.memory_space<vmem>>, vector<8x1xf32>
      tpu.vector_store %arg7[%c0, %c0_7], %18 {strides = array<i32>} : memref<8x1xf32, #tpu.memory_space<vmem>>, vector<8x1xf32>,
      %cst_8 = arith.constant 0.000000e+00 : f32
      %20 = vector.broadcast %cst_8 : f32 to vector<8x1xf32>
      %c0_9 = arith.constant 0 : index
      %c0_10 = arith.constant 0 : index
      %21 = vector.load %arg8[%c0_9, %c0_10] : memref<8x1xf32, #tpu.memory_space<vmem>>, vector<8x1xf32>
      tpu.vector_store %arg8[%c0_9, %c0_10], %20 {strides = array<i32>} : memref<8x1xf32, #tpu.memory_space<vmem>>, vector<8x1xf32>,
      %cst_11 = arith.constant 0.000000e+00 : f32
      %22 = vector.broadcast %cst_11 : f32 to vector<8x32xf32>
      %c0_12 = arith.constant 0 : index
      %c0_13 = arith.constant 0 : index
      %23 = vector.load %arg9[%c0_12, %c0_13] : memref<8x32xf32, #tpu.memory_space<vmem>>, vector<8x32xf32>
      tpu.vector_store %arg9[%c0_12, %c0_13], %22 {strides = array<i32>} : memref<8x32xf32, #tpu.memory_space<vmem>>, vector<8x32xf32>,
    } else {
    }
    %7 = arith.cmpi sle, %3, %0 : i32
    %8 = arith.extui %7 : i1 to i32
    %c0_i32_3 = arith.constant 0 : i32
    %9 = arith.cmpi ne, %8, %c0_i32_3 : i32
    scf.if %9 {
      %c0 = arith.constant 0 : index
      %c0_7 = arith.constant 0 : index
      %c0_8 = arith.constant 0 : index
      %18 = vector.load %arg3[%c0, %c0_7, %c0_8] : memref<1x8x32xf32, #tpu.memory_space<vmem>>, vector<1x8x32xf32>
      %19 = vector.shape_cast %18 : vector<1x8x32xf32> to vector<8x32xf32>
      %cst = arith.constant 0.176776692 : f32
      %20 = vector.broadcast %cst : f32 to vector<8x32xf32>
      %21 = arith.mulf %19, %20 : vector<8x32xf32>
      %c0_9 = arith.constant 0 : index
      %c0_10 = arith.constant 0 : index
      %c0_11 = arith.constant 0 : index
      %22 = vector.load %arg4[%c0_9, %c0_10, %c0_11] : memref<1x8x32xf32, #tpu.memory_space<vmem>>, vector<1x8x32xf32>
      %23 = vector.shape_cast %22 : vector<1x8x32xf32> to vector<8x32xf32>
      %cst_12 = arith.constant dense<0.000000e+00> : vector<8x8xf32>
      %24 = tpu.matmul %21, %23, %cst_12 {dimension_numbers = #tpu.dot_dimension_numbers<[1], [1], [0], [0], [0, 0, 1, 0], [], []>} : vector<8x32xf32>, vector<8x32xf32>, vector<8x8xf32> -> vector<8x8xf32>
      %c0_13 = arith.constant 0 : index
      %c0_14 = arith.constant 0 : index
      %25 = vector.load %arg7[%c0_13, %c0_14] : memref<8x1xf32, #tpu.memory_space<vmem>>, vector<8x1xf32>
      %cst_15 = arith.constant dense<0xFF800000> : vector<8xf32>
      %26 = vector.multi_reduction <maximumf>, %24, %cst_15 [1] : vector<8x8xf32> to vector<8xf32>
      %27 = vector.shape_cast %26 : vector<8xf32> to vector<8x1xf32>
      %28 = arith.maximumf %25, %27 : vector<8x1xf32>
      %29 = arith.subf %25, %28 : vector<8x1xf32>
      %30 = math.exp %29 : vector<8x1xf32>
      %31 = vector.broadcast %28 : vector<8x1xf32> to vector<8x8xf32>
      %32 = arith.subf %24, %31 : vector<8x8xf32>
      %33 = math.exp %32 : vector<8x8xf32>
      %c0_16 = arith.constant 0 : index
      %c0_17 = arith.constant 0 : index
      %34 = vector.load %arg8[%c0_16, %c0_17] : memref<8x1xf32, #tpu.memory_space<vmem>>, vector<8x1xf32>
      %35 = arith.mulf %30, %34 : vector<8x1xf32>
      %cst_18 = arith.constant dense<0.000000e+00> : vector<8xf32>
      %36 = vector.multi_reduction <add>, %33, %cst_18 [1] : vector<8x8xf32> to vector<8xf32>
      %37 = vector.shape_cast %36 : vector<8xf32> to vector<8x1xf32>
      %38 = arith.addf %35, %37 : vector<8x1xf32>
      %c0_19 = arith.constant 0 : index
      %c0_20 = arith.constant 0 : index
      %39 = vector.load %arg8[%c0_19, %c0_20] : memref<8x1xf32, #tpu.memory_space<vmem>>, vector<8x1xf32>
      tpu.vector_store %arg8[%c0_19, %c0_20], %38 {strides = array<i32>} : memref<8x1xf32, #tpu.memory_space<vmem>>, vector<8x1xf32>,
      %c0_21 = arith.constant 0 : index
      %c0_22 = arith.constant 0 : index
      %40 = vector.load %arg9[%c0_21, %c0_22] : memref<8x32xf32, #tpu.memory_space<vmem>>, vector<8x32xf32>
      %41 = vector.broadcast %30 : vector<8x1xf32> to vector<8x32xf32>
      %42 = arith.mulf %41, %40 : vector<8x32xf32>
      %c0_23 = arith.constant 0 : index
      %c0_24 = arith.constant 0 : index
      %c0_25 = arith.constant 0 : index
      %43 = vector.load %arg5[%c0_23, %c0_24, %c0_25] : memref<1x8x32xf32, #tpu.memory_space<vmem>>, vector<1x8x32xf32>
      %44 = vector.shape_cast %43 : vector<1x8x32xf32> to vector<8x32xf32>
      %cst_26 = arith.constant dense<0.000000e+00> : vector<8x32xf32>
      %45 = tpu.matmul %33, %44, %cst_26 {dimension_numbers = #tpu.dot_dimension_numbers<[1], [0], [0], [1], [0, 0, 1, 1], [], []>} : vector<8x8xf32>, vector<8x32xf32>, vector<8x32xf32> -> vector<8x32xf32>
      %46 = arith.addf %42, %45 : vector<8x32xf32>
      %c0_27 = arith.constant 0 : index
      %c0_28 = arith.constant 0 : index
      %47 = vector.load %arg9[%c0_27, %c0_28] : memref<8x32xf32, #tpu.memory_space<vmem>>, vector<8x32xf32>
      tpu.vector_store %arg9[%c0_27, %c0_28], %46 {strides = array<i32>} : memref<8x32xf32, #tpu.memory_space<vmem>>, vector<8x32xf32>,
      %c0_29 = arith.constant 0 : index
      %c0_30 = arith.constant 0 : index
      %48 = vector.load %arg7[%c0_29, %c0_30] : memref<8x1xf32, #tpu.memory_space<vmem>>, vector<8x1xf32>
      tpu.vector_store %arg7[%c0_29, %c0_30], %28 {strides = array<i32>} : memref<8x1xf32, #tpu.memory_space<vmem>>, vector<8x1xf32>,
    } else {
    }
    %10 = arith.cmpi sle, %1, %2 : i32
    %11 = arith.cmpi sgt, %3, %0 : i32
    %12 = arith.andi %10, %11 : i1
    %13 = arith.extui %12 : i1 to i32
    %c0_i32_4 = arith.constant 0 : i32
    %14 = arith.cmpi ne, %13, %c0_i32_4 : i32
    scf.if %14 {
      %c0 = arith.constant 0 : index
      %c0_7 = arith.constant 0 : index
      %c0_8 = arith.constant 0 : index
      %18 = vector.load %arg3[%c0, %c0_7, %c0_8] : memref<1x8x32xf32, #tpu.memory_space<vmem>>, vector<1x8x32xf32>
      %19 = vector.shape_cast %18 : vector<1x8x32xf32> to vector<8x32xf32>
      %cst = arith.constant 0.176776692 : f32
      %20 = vector.broadcast %cst : f32 to vector<8x32xf32>
      %21 = arith.mulf %19, %20 : vector<8x32xf32>
      %c0_9 = arith.constant 0 : index
      %c0_10 = arith.constant 0 : index
      %c0_11 = arith.constant 0 : index
      %22 = vector.load %arg4[%c0_9, %c0_10, %c0_11] : memref<1x8x32xf32, #tpu.memory_space<vmem>>, vector<1x8x32xf32>
      %23 = vector.shape_cast %22 : vector<1x8x32xf32> to vector<8x32xf32>
      %cst_12 = arith.constant dense<0.000000e+00> : vector<8x8xf32>
      %24 = tpu.matmul %21, %23, %cst_12 {dimension_numbers = #tpu.dot_dimension_numbers<[1], [1], [0], [0], [0, 0, 1, 0], [], []>} : vector<8x32xf32>, vector<8x32xf32>, vector<8x8xf32> -> vector<8x8xf32>
      %25 = tpu.iota {dimensions = array<i32: 0>} : vector<8x8xi32>
      %26 = vector.broadcast %0 : i32 to vector<8x8xi32>
      %27 = arith.addi %25, %26 : vector<8x8xi32>
      %28 = tpu.iota {dimensions = array<i32: 1>} : vector<8x8xi32>
      %29 = vector.broadcast %1 : i32 to vector<8x8xi32>
      %30 = arith.addi %28, %29 : vector<8x8xi32>
      %31 = arith.cmpi sgt, %30, %27 : vector<8x8xi32>
      %cst_13 = arith.constant -1.000000e+04 : f32
      %32 = vector.broadcast %cst_13 : f32 to vector<8x8xf32>
      %33 = arith.select %31, %32, %24 : vector<8x8xi1>, vector<8x8xf32>
      %c0_14 = arith.constant 0 : index
      %c0_15 = arith.constant 0 : index
      %34 = vector.load %arg7[%c0_14, %c0_15] : memref<8x1xf32, #tpu.memory_space<vmem>>, vector<8x1xf32>
      %cst_16 = arith.constant dense<0xFF800000> : vector<8xf32>
      %35 = vector.multi_reduction <maximumf>, %33, %cst_16 [1] : vector<8x8xf32> to vector<8xf32>
      %36 = vector.shape_cast %35 : vector<8xf32> to vector<8x1xf32>
      %37 = arith.maximumf %34, %36 : vector<8x1xf32>
      %38 = arith.subf %34, %37 : vector<8x1xf32>
      %39 = math.exp %38 : vector<8x1xf32>
      %40 = vector.broadcast %37 : vector<8x1xf32> to vector<8x8xf32>
      %41 = arith.subf %33, %40 : vector<8x8xf32>
      %42 = math.exp %41 : vector<8x8xf32>
      %c0_17 = arith.constant 0 : index
      %c0_18 = arith.constant 0 : index
      %43 = vector.load %arg8[%c0_17, %c0_18] : memref<8x1xf32, #tpu.memory_space<vmem>>, vector<8x1xf32>
      %44 = arith.mulf %39, %43 : vector<8x1xf32>
      %cst_19 = arith.constant dense<0.000000e+00> : vector<8xf32>
      %45 = vector.multi_reduction <add>, %42, %cst_19 [1] : vector<8x8xf32> to vector<8xf32>
      %46 = vector.shape_cast %45 : vector<8xf32> to vector<8x1xf32>
      %47 = arith.addf %44, %46 : vector<8x1xf32>
      %c0_20 = arith.constant 0 : index
      %c0_21 = arith.constant 0 : index
      %48 = vector.load %arg8[%c0_20, %c0_21] : memref<8x1xf32, #tpu.memory_space<vmem>>, vector<8x1xf32>
      tpu.vector_store %arg8[%c0_20, %c0_21], %47 {strides = array<i32>} : memref<8x1xf32, #tpu.memory_space<vmem>>, vector<8x1xf32>,
      %c0_22 = arith.constant 0 : index
      %c0_23 = arith.constant 0 : index
      %49 = vector.load %arg9[%c0_22, %c0_23] : memref<8x32xf32, #tpu.memory_space<vmem>>, vector<8x32xf32>
      %50 = vector.broadcast %39 : vector<8x1xf32> to vector<8x32xf32>
      %51 = arith.mulf %50, %49 : vector<8x32xf32>
      %c0_24 = arith.constant 0 : index
      %c0_25 = arith.constant 0 : index
      %c0_26 = arith.constant 0 : index
      %52 = vector.load %arg5[%c0_24, %c0_25, %c0_26] : memref<1x8x32xf32, #tpu.memory_space<vmem>>, vector<1x8x32xf32>
      %53 = vector.shape_cast %52 : vector<1x8x32xf32> to vector<8x32xf32>
      %cst_27 = arith.constant dense<0.000000e+00> : vector<8x32xf32>
      %54 = tpu.matmul %42, %53, %cst_27 {dimension_numbers = #tpu.dot_dimension_numbers<[1], [0], [0], [1], [0, 0, 1, 1], [], []>} : vector<8x8xf32>, vector<8x32xf32>, vector<8x32xf32> -> vector<8x32xf32>
      %55 = arith.addf %51, %54 : vector<8x32xf32>
      %c0_28 = arith.constant 0 : index
      %c0_29 = arith.constant 0 : index
      %56 = vector.load %arg9[%c0_28, %c0_29] : memref<8x32xf32, #tpu.memory_space<vmem>>, vector<8x32xf32>
      tpu.vector_store %arg9[%c0_28, %c0_29], %55 {strides = array<i32>} : memref<8x32xf32, #tpu.memory_space<vmem>>, vector<8x32xf32>,
      %c0_30 = arith.constant 0 : index
      %c0_31 = arith.constant 0 : index
      %57 = vector.load %arg7[%c0_30, %c0_31] : memref<8x1xf32, #tpu.memory_space<vmem>>, vector<8x1xf32>
      tpu.vector_store %arg7[%c0_30, %c0_31], %37 {strides = array<i32>} : memref<8x1xf32, #tpu.memory_space<vmem>>, vector<8x1xf32>,
    } else {
    }
    %c0_i32_5 = arith.constant 0 : i32
    %15 = arith.cmpi eq, %arg2, %c0_i32_5 : i32
    %16 = arith.extui %15 : i1 to i32
    %c0_i32_6 = arith.constant 0 : i32
    %17 = arith.cmpi ne, %16, %c0_i32_6 : i32
    scf.if %17 {
      %c0 = arith.constant 0 : index
      %c0_7 = arith.constant 0 : index
      %18 = vector.load %arg8[%c0, %c0_7] : memref<8x1xf32, #tpu.memory_space<vmem>>, vector<8x1xf32>
      %19 = tpu.reciprocal %18 : vector<8x1xf32> -> vector<8x1xf32>
      %c0_8 = arith.constant 0 : index
      %c0_9 = arith.constant 0 : index
      %20 = vector.load %arg9[%c0_8, %c0_9] : memref<8x32xf32, #tpu.memory_space<vmem>>, vector<8x32xf32>
      %21 = vector.broadcast %19 : vector<8x1xf32> to vector<8x32xf32>
      %22 = arith.mulf %20, %21 : vector<8x32xf32>
      %c0_10 = arith.constant 0 : index
      %c0_11 = arith.constant 0 : index
      %c0_12 = arith.constant 0 : index
      %23 = vector.load %arg6[%c0_10, %c0_11, %c0_12] : memref<1x8x32xf32, #tpu.memory_space<vmem>>, vector<1x8x32xf32>
      %24 = vector.shape_cast %23 : vector<1x8x32xf32> to vector<8x32xf32>
      %25 = vector.shape_cast %22 : vector<8x32xf32> to vector<1x8x32xf32>
      tpu.vector_store %arg6[%c0_10, %c0_11, %c0_12], %25 {strides = array<i32>} : memref<1x8x32xf32, #tpu.memory_space<vmem>>, vector<1x8x32xf32>,
    } else {
    }
    return
  }
  func.func @transform_0(%arg0: i32, %arg1: i32, %arg2: i32) -> (i32, i32, i32) {
    %c0_i32 = arith.constant 0 : i32
    %c0_i32_0 = arith.constant 0 : i32
    return %arg0, %arg1, %c0_i32 : i32, i32, i32
  }
  func.func @transform_1(%arg0: i32, %arg1: i32, %arg2: i32) -> (i32, i32, i32) {
    %c0_i32 = arith.constant 0 : i32
    %c0_i32_0 = arith.constant 0 : i32
    return %arg0, %arg2, %c0_i32 : i32, i32, i32
  }
  func.func @transform_2(%arg0: i32, %arg1: i32, %arg2: i32) -> (i32, i32, i32) {
    %c0_i32 = arith.constant 0 : i32
    %c0_i32_0 = arith.constant 0 : i32
    return %arg0, %arg2, %c0_i32 : i32, i32, i32
  }
  func.func @transform_3(%arg0: i32, %arg1: i32, %arg2: i32) -> (i32, i32, i32) {
    %c0_i32 = arith.constant 0 : i32
    %c0_i32_0 = arith.constant 0 : i32
    return %arg0, %arg1, %c0_i32 : i32, i32, i32
  }
}

</mosaic_0001>

<llo_original>
// kernel: tpu_custom_call.1
$region0: #{tpu_custom_call.1}
  #allocation0 [shape = 'u32[]', space=smem, size = 0x4, offset = 0x4, fixed_abs, tag = 'smem constant byte address 0x4 - core index']
  #allocation1 [shape = 'u32[144,128]{1,0:T(1,128)}', space=vmem, size = 0x12000, scoped, tag = 'internal scratch']
  #allocation2 [shape = 'f32[8,1]{1,0:T(8,128)}', space=vmem, size = 0x1000, scoped, tag = 'scratch operand']
  #allocation3 [shape = 'f32[8,1]{1,0:T(8,128)}', space=vmem, size = 0x1000, scoped, tag = 'scratch operand']
  #allocation4 [shape = 'f32[8,32]{1,0:T(8,128)}', space=vmem, size = 0x1000, scoped, tag = 'scratch operand']
  %s0 = inlined_call_operand.hbm [shape: f32[8,8,32], index: 0, kind: input, shape index: {}]
  %s1 = inlined_call_operand.hbm [shape: f32[8,8,32], index: 1, kind: input, shape index: {}]
  %s2 = inlined_call_operand.hbm [shape: f32[8,8,32], index: 2, kind: input, shape index: {}]
  %s3 = inlined_call_operand.hbm [shape: f32[8,8,32], index: 3, kind: output, shape index: {}]
  %s4 = sld [smem:[#allocation0]]
  $region73: #{tpu_custom_call.1} parent=0
    _
  %s6 = ssub.s32 1, %s4
  %s7 = scalar_select 0, %s6, %s4
  $region1: #{tpu_custom_call.1} parent=0
    #allocation5 [shape = 'u8[8192]{0}', space=vmem, size = 0x2000, scoped, tag = 'input window, operand 0']
    #allocation6 [shape = 's32[2]{0}', space=sflag, size = 0x8, scoped, tag = 'scoped memory for tpu_custom_call.1']
    #allocation7 [shape = 's32[2]{0}', space=sflag, size = 0x8, scoped, tag = 'scoped memory for tpu_custom_call.1']
    #allocation8 [shape = 'u8[8192]{0}', space=vmem, size = 0x2000, scoped, tag = 'input window, operand 1']
    #allocation9 [shape = 's32[2]{0}', space=sflag, size = 0x8, scoped, tag = 'scoped memory for tpu_custom_call.1']
    #allocation10 [shape = 'u8[8192]{0}', space=vmem, size = 0x2000, scoped, tag = 'input window, operand 2']
    #allocation11 [shape = 'u8[8192]{0}', space=vmem, size = 0x2000, scoped, tag = 'output window, operand 0']
    %8 = vsyncpa [#allocation6], 0
    %s9 = scalar_lea.sflag [#allocation6], 1
    %10 = vsyncpa %s9, 0
    %11 = vsyncpa [#allocation9], 0
    %s12 = scalar_lea.sflag [#allocation9], 1
    %13 = vsyncpa %s12, 0
    %14 = vsyncpa [#allocation7], 0
    %s15 = scalar_lea.sflag [#allocation7], 1
    %16 = vsyncpa %s15, 0
    loop: start=0, step=1, limit=10
    $region2: #{tpu_custom_call.1} parent=1 // loop_pre_header
      _
    $region3: #{tpu_custom_call.1} parent=1 // loop_header
      %s18 = sphi 0, %s22
      %p19 = scmp.ge.s32.totalorder %s18, 10
      %s25 = sphi 0, %s44
      %s26 = sphi 0, %s40
      %s27 = sphi 0, %s36
      %s28 = sphi 0, %s25
      %s29 = sphi 0, %s26
      %s30 = sphi 0, %s27
      %s31 = sphi 0, %s28
      %s32 = sphi 0, %s29
      %s33 = sphi 0, %s30
      %s49 = sphi 0, %s51
      %s52 = sphi 0, %s49
      %s53 = sphi 0, %s52
      %s69 = sphi 0, %s53
      %s77 = sphi 0, %s79
      %s80 = sphi 0, %s77
      %s81 = sphi 0, %s80
      %s97 = sphi 0, %s81
      %s105 = sphi 0, %s107
      %s108 = sphi 0, %s105
      %s109 = sphi 0, %s108
      %s125 = sphi 0, %s109
      %s133 = sphi 0, %s135
      %s136 = sphi 0, %s133
      %s137 = sphi 0, %s136
      %s153 = sphi 0, %s137
    $region4: #{tpu_custom_call.1} parent=1 // loop_header_branch
      %21 = sbr.rel (%p19) target = $region8
    $region5: #{tpu_custom_call.1} parent=1 // loop_body
      %s23 = ssub.s32 %s18, 1
      %s24 = ssub.s32 %s18, 2
      %s34 = sadd.s32 1, %s27
      %p35 = scmp.ge.s32.totalorder %s34, 1
      %s36 = scalar_select %p35, 0, %s34
      %s37 = sadd.s32 1, %s26
      %s38 = scalar_select %p35, %s37, %s26
      %p39 = scmp.ge.s32.totalorder %s38, 1
      %s40 = scalar_select %p39, 0, %s38
      %s41 = sadd.s32 1, %s25
      %s42 = scalar_select %p39, %s41, %s25
      %p43 = scmp.ge.s32.totalorder %s42, 8
      %s44 = scalar_select %p43, 0, %s42
      %s45 = ssub.s32 %s25, %s44
      %s46 = ssub.s32 %s26, %s40
      %s47 = sor.u32 %s45, %s46
      %p48 = scmp.eq.s32.totalorder %s47, 0
      %s50 = sadd.s32 %s49, 1
      %s51 = scalar_select %p48, %s49, %s50
      %p54 = pneg %p48
      %p55 = scmp.eq.s32.totalorder %s18, 7
      %p56 = por %p54, %p55
      %p57 = scmp.ne.s32.totalorder %s49, %s52
      %p58 = scmp.eq.s32.totalorder %s18, 0
      %p59 = por %p57, %p58
      %p60 = scmp.ne.s32.totalorder %s49, %s52
      %p61 = scmp.eq.s32.totalorder %s23, 7
      %p62 = por %p60, %p61
      %p63 = scmp.ne.s32.totalorder %s52, %s53
      %p64 = scmp.eq.s32.totalorder %s23, 0
      %p65 = por %p63, %p64
      %p66 = scmp.ne.s32.totalorder %s52, %s53
      %p67 = scmp.eq.s32.totalorder %s24, 7
      %p68 = por %p66, %p67
      %p70 = scmp.ne.s32.totalorder %s53, %s69
      %p71 = scmp.eq.s32.totalorder %s24, 0
      %p72 = por %p70, %p71
      %s73 = ssub.s32 %s25, %s44
      %s74 = ssub.s32 %s27, %s36
      %s75 = sor.u32 %s73, %s74
      %p76 = scmp.eq.s32.totalorder %s75, 0
      %s78 = sadd.s32 %s77, 1
      %s79 = scalar_select %p76, %s77, %s78
      %p82 = pneg %p76
      %p83 = scmp.eq.s32.totalorder %s18, 7
      %p84 = por %p82, %p83
      %p85 = scmp.ne.s32.totalorder %s77, %s80
      %p86 = scmp.eq.s32.totalorder %s18, 0
      %p87 = por %p85, %p86
      %p88 = scmp.ne.s32.totalorder %s77, %s80
      %p89 = scmp.eq.s32.totalorder %s23, 7
      %p90 = por %p88, %p89
      %p91 = scmp.ne.s32.totalorder %s80, %s81
      %p92 = scmp.eq.s32.totalorder %s23, 0
      %p93 = por %p91, %p92
      %p94 = scmp.ne.s32.totalorder %s80, %s81
      %p95 = scmp.eq.s32.totalorder %s24, 7
      %p96 = por %p94, %p95
      %p98 = scmp.ne.s32.totalorder %s81, %s97
      %p99 = scmp.eq.s32.totalorder %s24, 0
      %p100 = por %p98, %p99
      %s101 = ssub.s32 %s25, %s44
      %s102 = ssub.s32 %s27, %s36
      %s103 = sor.u32 %s101, %s102
      %p104 = scmp.eq.s32.totalorder %s103, 0
      %s106 = sadd.s32 %s105, 1
      %s107 = scalar_select %p104, %s105, %s106
      %p110 = pneg %p104
      %p111 = scmp.eq.s32.totalorder %s18, 7
      %p112 = por %p110, %p111
      %p113 = scmp.ne.s32.totalorder %s105, %s108
      %p114 = scmp.eq.s32.totalorder %s18, 0
      %p115 = por %p113, %p114
      %p116 = scmp.ne.s32.totalorder %s105, %s108
      %p117 = scmp.eq.s32.totalorder %s23, 7
      %p118 = por %p116, %p117
      %p119 = scmp.ne.s32.totalorder %s108, %s109
      %p120 = scmp.eq.s32.totalorder %s23, 0
      %p121 = por %p119, %p120
      %p122 = scmp.ne.s32.totalorder %s108, %s109
      %p123 = scmp.eq.s32.totalorder %s24, 7
      %p124 = por %p122, %p123
      %p126 = scmp.ne.s32.totalorder %s109, %s125
      %p127 = scmp.eq.s32.totalorder %s24, 0
      %p128 = por %p126, %p127
      %s129 = ssub.s32 %s25, %s44
      %s130 = ssub.s32 %s26, %s40
      %s131 = sor.u32 %s129, %s130
      %p132 = scmp.eq.s32.totalorder %s131, 0
      %s134 = sadd.s32 %s133, 1
      %s135 = scalar_select %p132, %s133, %s134
      %p138 = pneg %p132
      %p139 = scmp.eq.s32.totalorder %s18, 7
      %p140 = por %p138, %p139
      %p141 = scmp.ne.s32.totalorder %s133, %s136
      %p142 = scmp.eq.s32.totalorder %s18, 0
      %p143 = por %p141, %p142
      %p144 = scmp.ne.s32.totalorder %s133, %s136
      %p145 = scmp.eq.s32.totalorder %s23, 7
      %p146 = por %p144, %p145
      %p147 = scmp.ne.s32.totalorder %s136, %s137
      %p148 = scmp.eq.s32.totalorder %s23, 0
      %p149 = por %p147, %p148
      %p150 = scmp.ne.s32.totalorder %s136, %s137
      %p151 = scmp.eq.s32.totalorder %s24, 7
      %p152 = por %p150, %p151
      %p154 = scmp.ne.s32.totalorder %s137, %s153
      %p155 = scmp.eq.s32.totalorder %s24, 0
      %p156 = por %p154, %p155
      %p157 = scmp.le.s32.totalorder 1, %s18
      %p158 = scmp.lt.s32.totalorder %s18, 9
      %p159 = pnand %p157, %p158
      %p160 = pneg %p159
      // Predicated region
      $region9: #{tpu_custom_call.1} parent=5 // pred_check
        _
      $region10: #{tpu_custom_call.1} parent=5 // pred_check_branch
        %162 = sbr.rel (%p159) target = $region12
      $region11: #{tpu_custom_call.1} parent=5 // pred_region
        %s163 = ssub.s32 %s18, 1
      $region12: #{tpu_custom_call.1} parent=5 // pred_fallthru
        _
      %p164 = scmp.lt.s32.totalorder %s18, 8
      // Predicated region
      $region13: #{tpu_custom_call.1} parent=5 // pred_check
        %p165 = pneg %p164
      $region14: #{tpu_custom_call.1} parent=5 // pred_check_branch
        %167 = sbr.rel (%p165) target = $region16
      $region15: #{tpu_custom_call.1} parent=5 // pred_region
        // Predicated region
        $region17: #{tpu_custom_call.1} parent=15 // pred_check
          %p168 = pneg %p59
        $region18: #{tpu_custom_call.1} parent=15 // pred_check_branch
          %170 = sbr.rel (%p168) target = $region20
        $region19: #{tpu_custom_call.1} parent=15 // pred_region
          %s171 = sand.u32 %s49, 1
          %s172 = scalar_lea.sflag [#allocation6], %s171
          %s173 = sand.u32 %s49, 1
          %s174 = smul.addr %s173, 8
          %s175 = scalar_lea.vmem [#allocation5], %s174
          %s177 = ssub.s32 128, 128
          %178 = vsyncadd %s172, %s177
          %s179 = sadd.s32 %s26, %s25
          %s180 = smul.addr %s179, 128
          %s181 = scalar_lea.hbm %s0, %s180
          %s183 = sshll.u32 %s175, 4
          %s184 = int_to_ptr.vmem [resolvable:$true] %s183
          %186 = dma.hbm_to_vmem [thread:$0]  %s181, 128, %s184, %s172
        $region20: #{tpu_custom_call.1} parent=15 // pred_fallthru
          _
        // Predicated region
        $region21: #{tpu_custom_call.1} parent=15 // pred_check
          %p187 = pneg %p87
        $region22: #{tpu_custom_call.1} parent=15 // pred_check_branch
          %189 = sbr.rel (%p187) target = $region24
        $region23: #{tpu_custom_call.1} parent=15 // pred_region
          %s190 = sand.u32 %s18, 1
          %s191 = scalar_lea.sflag [#allocation9], %s190
          %s192 = sand.u32 %s77, 1
          %s193 = smul.addr %s192, 8
          %s194 = scalar_lea.vmem [#allocation8], %s193
          %s196 = ssub.s32 128, 128
          %197 = vsyncadd %s191, %s196
          %s198 = sadd.s32 %s27, %s25
          %s199 = smul.addr %s198, 128
          %s200 = scalar_lea.hbm %s1, %s199
          %s202 = sshll.u32 %s194, 4
          %s203 = int_to_ptr.vmem [resolvable:$true] %s202
          %205 = dma.hbm_to_vmem [thread:$0]  %s200, 128, %s203, %s191
        $region24: #{tpu_custom_call.1} parent=15 // pred_fallthru
          _
        // Predicated region
        $region25: #{tpu_custom_call.1} parent=15 // pred_check
          %p206 = pneg %p115
        $region26: #{tpu_custom_call.1} parent=15 // pred_check_branch
          %208 = sbr.rel (%p206) target = $region28
        $region27: #{tpu_custom_call.1} parent=15 // pred_region
          %s209 = sand.u32 %s18, 1
          %s210 = scalar_lea.sflag [#allocation9], %s209
          %s211 = sand.u32 %s105, 1
          %s212 = smul.addr %s211, 8
          %s213 = scalar_lea.vmem [#allocation10], %s212
          %s215 = ssub.s32 128, 128
          %216 = vsyncadd %s210, %s215
          %s217 = sadd.s32 %s27, %s25
          %s218 = smul.addr %s217, 128
          %s219 = scalar_lea.hbm %s2, %s218
          %s221 = sshll.u32 %s213, 4
          %s222 = int_to_ptr.vmem [resolvable:$true] %s221
          %224 = dma.hbm_to_vmem [thread:$0]  %s219, 128, %s222, %s210
        $region28: #{tpu_custom_call.1} parent=15 // pred_fallthru
          _
      $region16: #{tpu_custom_call.1} parent=5 // pred_fallthru
        _
      %p225 = scmp.le.s32.totalorder 1, %s18
      %p226 = scmp.lt.s32.totalorder %s18, 9
      %p227 = pnand %p225, %p226
      %p228 = pneg %p227
      // Predicated region
      $region29: #{tpu_custom_call.1} parent=5 // pred_check
        _
      $region30: #{tpu_custom_call.1} parent=5 // pred_check_branch
        %230 = sbr.rel (%p227) target = $region32
      $region31: #{tpu_custom_call.1} parent=5 // pred_region
        %s231 = ssub.s32 %s18, 1
        %s232 = sand.u32 %s52, 1
        %s233 = scalar_lea.sflag [#allocation6], %s232
        %s234 = sand.u32 %s52, 1
        %s235 = smul.addr %s234, 8
        %s236 = scalar_lea.vmem [#allocation5], %s235
        // Predicated region
        $region33: #{tpu_custom_call.1} parent=31 // pred_check
          %p237 = pneg %p65
        $region34: #{tpu_custom_call.1} parent=31 // pred_check_branch
          %239 = sbr.rel (%p237) target = $region36
        $region35: #{tpu_custom_call.1} parent=31 // pred_region
          %240 = dma.done %s233, 128
        $region36: #{tpu_custom_call.1} parent=31 // pred_fallthru
          _
        %s241 = sand.u32 %s23, 1
        %s242 = scalar_lea.sflag [#allocation9], %s241
        %s243 = sand.u32 %s80, 1
        %s244 = smul.addr %s243, 8
        %s245 = scalar_lea.vmem [#allocation8], %s244
        // Predicated region
        $region37: #{tpu_custom_call.1} parent=31 // pred_check
          %p246 = pneg %p93
        $region38: #{tpu_custom_call.1} parent=31 // pred_check_branch
          %248 = sbr.rel (%p246) target = $region40
        $region39: #{tpu_custom_call.1} parent=31 // pred_region
          %249 = dma.done %s242, 128
        $region40: #{tpu_custom_call.1} parent=31 // pred_fallthru
          _
        %s250 = sand.u32 %s23, 1
        %s251 = scalar_lea.sflag [#allocation9], %s250
        %s252 = sand.u32 %s108, 1
        %s253 = smul.addr %s252, 8
        %s254 = scalar_lea.vmem [#allocation10], %s253
        // Predicated region
        $region41: #{tpu_custom_call.1} parent=31 // pred_check
          %p255 = pneg %p121
        $region42: #{tpu_custom_call.1} parent=31 // pred_check_branch
          %257 = sbr.rel (%p255) target = $region44
        $region43: #{tpu_custom_call.1} parent=31 // pred_region
          %258 = dma.done %s251, 128
        $region44: #{tpu_custom_call.1} parent=31 // pred_fallthru
          _
        %s259 = sand.u32 %s52, 1
        %s260 = scalar_lea.sflag [#allocation6], %s259
        %s261 = sand.u32 %s52, 1
        %s262 = smul.addr %s261, 8
        %s263 = scalar_lea.vmem [#allocation5], %s262
        %p264 = pneg %p65
        %p265 = pneg %p62
        %s266 = sand.u32 %s23, 1
        %s267 = scalar_lea.sflag [#allocation9], %s266
        %s268 = sand.u32 %s80, 1
        %s269 = smul.addr %s268, 8
        %s270 = scalar_lea.vmem [#allocation8], %s269
        %p271 = pneg %p93
        %p272 = pneg %p90
        %s273 = sand.u32 %s23, 1
        %s274 = scalar_lea.sflag [#allocation9], %s273
        %s275 = sand.u32 %s108, 1
        %s276 = smul.addr %s275, 8
        %s277 = scalar_lea.vmem [#allocation10], %s276
        %p278 = pneg %p121
        %p279 = pneg %p118
        %p280 = pneg %p149
        %p281 = pneg %p146
        %s282 = sand.u32 %s136, 1
        %s283 = scalar_lea.sflag [#allocation7], %s282
        %s284 = sand.u32 %s136, 1
        %s285 = smul.addr %s284, 8
        %s286 = scalar_lea.vmem [#allocation11], %s285
        %s287 = smul.u32 %s29, 8
        %s288 = smul.u32 %s30, 8
        %s289 = sadd.s32 %s287, 7
        %s290 = sadd.s32 %s288, 7
        %p291 = scmp.eq.s32.totalorder %s30, 0
        // Predicated region
        $region45: #{tpu_custom_call.1} parent=31 // pred_check
          %p292 = pneg %p291
        $region46: #{tpu_custom_call.1} parent=31 // pred_check_branch
          %294 = sbr.rel (%p292) target = $region48
        $region47: #{tpu_custom_call.1} parent=31 // pred_region
          %vm295 = vcmask 7168
          %296 = vst.msk [vmem:[#allocation2] sm:$0xff] %vm295, -inf
          %297 = vst.msk [vmem:[#allocation3] sm:$0xff] %vm295, 0.0
          %vm298 = vcmask 261120
          %299 = vst.msk [vmem:[#allocation4] sm:$0xff] %vm298, 0.0
        $region48: #{tpu_custom_call.1} parent=31 // pred_fallthru
          _
        %p300 = scmp.le.s32.totalorder %s290, %s287
        // Predicated region
        $region49: #{tpu_custom_call.1} parent=31 // pred_check
          %p301 = pneg %p300
        $region50: #{tpu_custom_call.1} parent=31 // pred_check_branch
          %303 = sbr.rel (%p301) target = $region52
        $region51: #{tpu_custom_call.1} parent=31 // pred_region
          %v304 = vld [vmem:[%s236] sm:$0xff]
          %v305 = vmul.f32 %v304, 0.17677669
          %v306 = vld [vmem:[%s245] sm:$0xff]
          %vm307 = vcmask 261120
          %v309 = vsel %vm307, %v305, 0
          %v312 = vsel %vm307, %v306, 0
          %314 = vmatprep.subr.mxu0 0.0
          %315 = vmatpush1.xpose.msra.mxu0 0.0
          %316 = vmatprep.subr.mxu0 0.0
          %317 = vmatpush1.xpose.msra.mxu0 0.0
          %318 = vmatprep.subr.mxu0 0.0
          %319 = vmatpush1.xpose.msra.mxu0 0.0
          %320 = vmatprep.subr.mxu0 0.0
          %321 = vmatpush1.xpose.msra.mxu0 0.0
          %322 = vmatprep.subr.mxu0 0.0
          %323 = vmatpush1.xpose.msra.mxu0 0.0
          %324 = vmatprep.subr.mxu0 0.0
          %325 = vmatpush1.xpose.msra.mxu0 0.0
          %326 = vmatprep.subr.mxu0 0.0
          %327 = vmatpush1.xpose.msra.mxu0 0.0
          %328 = vmatprep.subr.mxu0 0.0
          %329 = vmatpush1.xpose.msra.mxu0 0.0
          %330 = vmatprep.subr.mxu0 0.0
          %331 = vmatpush1.xpose.msra.mxu0 0.0
          %332 = vmatprep.subr.mxu0 0.0
          %333 = vmatpush1.xpose.msra.mxu0 0.0
          %334 = vmatprep.subr.mxu0 0.0
          %335 = vmatpush1.xpose.msra.mxu0 0.0
          %336 = vmatprep.subr.mxu0 0.0
          %337 = vmatpush1.xpose.msra.mxu0 0.0
          %338 = vmatprep.subr.mxu0 0.0
          %339 = vmatpush1.xpose.msra.mxu0 0.0
          %340 = vmatprep.subr.mxu0 0.0
          %341 = vmatpush1.xpose.msra.mxu0 0.0
          %342 = vmatprep.subr.mxu0 0.0
          %343 = vmatpush1.xpose.msra.mxu0 0.0
          %344 = vmatprep.subr.mxu0 0.0
          %345 = vmatpush1.xpose.msra.mxu0 %v312
          %346 = vmatprep.subr.mxu0 0.0
          %347 = vmatpush2.xpose.msra.mxu0 0.0
          %348 = vmatprep.subr.mxu0 0.0
          %349 = vmatpush2.xpose.msra.mxu0 0.0
          %350 = vmatprep.subr.mxu0 0.0
          %351 = vmatpush2.xpose.msra.mxu0 0.0
          %352 = vmatprep.subr.mxu0 0.0
          %353 = vmatpush2.xpose.msra.mxu0 0.0
          %354 = vmatprep.subr.mxu0 0.0
          %355 = vmatpush2.xpose.msra.mxu0 0.0
          %356 = vmatprep.subr.mxu0 0.0
          %357 = vmatpush2.xpose.msra.mxu0 0.0
          %358 = vmatprep.subr.mxu0 0.0
          %359 = vmatpush2.xpose.msra.mxu0 0.0
          %360 = vmatprep.subr.mxu0 0.0
          %361 = vmatpush2.xpose.msra.mxu0 0.0
          %362 = vmatprep.subr.mxu0 0.0
          %363 = vmatpush2.xpose.msra.mxu0 0.0
          %364 = vmatprep.subr.mxu0 0.0
          %365 = vmatpush2.xpose.msra.mxu0 0.0
          %366 = vmatprep.subr.mxu0 0.0
          %367 = vmatpush2.xpose.msra.mxu0 0.0
          %368 = vmatprep.subr.mxu0 0.0
          %369 = vmatpush2.xpose.msra.mxu0 0.0
          %370 = vmatprep.subr.mxu0 0.0
          %371 = vmatpush2.xpose.msra.mxu0 0.0
          %372 = vmatprep.subr.mxu0 0.0
          %373 = vmatpush2.xpose.msra.mxu0 0.0
          %374 = vmatprep.subr.mxu0 0.0
          %375 = vmatpush2.xpose.msra.mxu0 0.0
          %376 = vmatprep.subr.mxu0 0.0
          %377 = vmatpush2.xpose.msra.mxu0 0.0
          %378 = vmatprep.mubr.f32.mxu0 0.0
          %379 = vmatmul.mubr.f32.gmra.mxu0 %v309
          %v380 = vpop.f32.mrf.mxu0
          %v381 = vadd.f32 0.0, %v380
          %v382 = vpop.f32.mrf.mxu0
          %383 = vdwg.mxu0
          %v384 = vld [vmem:[#allocation2] sm:$0xff]
          %vm385 = vcmask 64512
          %v386 = vsel %vm385, %v381, -inf
          %387 = vmax.xlane.f32.xlu0 %v386
          %v388 = vpop.xlane.xlu0 %387
          %v389 = vmax.f32 %v384, %v388
          %v390 = vsub.f32 %v384, %v389
          %v391 = vmul.f32 %v390, 1.442695
          %v392 = vpow.pop %v391
          %394 = vset.pattern.permute.xlu0 0
          %395 = vperm.xlu0 %394, %v389
          %v396 = vpop.permute.xlu0 %395
          %v398 = vsub.f32 %v381, %v396
          %v399 = vmul.f32 %v398, 1.442695
          %v400 = vpow.pop %v399
          %v401 = vld [vmem:[#allocation3] sm:$0xff]
          %v402 = vmul.f32 %v392, %v401
          %v403 = vsel %vm385, %v400, 0.0
          %404 = vadd.xlane.f32.xlu0 %v403
          %v405 = vpop.xlane.xlu0 %404
          %v406 = vadd.f32 %v402, %v405
          %vm407 = vcmask 7168
          %408 = vst.msk [vmem:[#allocation3] sm:$0xff] %vm407, %v406
          %v409 = vld [vmem:[#allocation4] sm:$0xff]
          %411 = vset.pattern.permute.xlu0 0
          %412 = vperm.xlu0 %411, %v392
          %v413 = vpop.permute.xlu0 %412
          %v415 = vmul.f32 %v413, %v409
          %v416 = vld [vmem:[%s254] sm:$0xff]
          %v418 = vsel %vm385, %v400, 0
          %420 = vmatprep.subr.mxu0 0.0
          %421 = vmatpush1.msra.mxu0 0.0
          %422 = vmatprep.subr.mxu0 0.0
          %423 = vmatpush1.msra.mxu0 0.0
          %424 = vmatprep.subr.mxu0 0.0
          %425 = vmatpush1.msra.mxu0 0.0
          %426 = vmatprep.subr.mxu0 0.0
          %427 = vmatpush1.msra.mxu0 0.0
          %428 = vmatprep.subr.mxu0 0.0
          %429 = vmatpush1.msra.mxu0 0.0
          %430 = vmatprep.subr.mxu0 0.0
          %431 = vmatpush1.msra.mxu0 0.0
          %432 = vmatprep.subr.mxu0 0.0
          %433 = vmatpush1.msra.mxu0 0.0
          %434 = vmatprep.subr.mxu0 0.0
          %435 = vmatpush1.msra.mxu0 0.0
          %436 = vmatprep.subr.mxu0 0.0
          %437 = vmatpush1.msra.mxu0 0.0
          %438 = vmatprep.subr.mxu0 0.0
          %439 = vmatpush1.msra.mxu0 0.0
          %440 = vmatprep.subr.mxu0 0.0
          %441 = vmatpush1.msra.mxu0 0.0
          %442 = vmatprep.subr.mxu0 0.0
          %443 = vmatpush1.msra.mxu0 0.0
          %444 = vmatprep.subr.mxu0 0.0
          %445 = vmatpush1.msra.mxu0 0.0
          %446 = vmatprep.subr.mxu0 0.0
          %447 = vmatpush1.msra.mxu0 0.0
          %448 = vmatprep.subr.mxu0 0.0
          %449 = vmatpush1.msra.mxu0 0.0
          %450 = vmatprep.subr.mxu0 0.0
          %451 = vmatpush1.msra.mxu0 %v416
          %452 = vmatprep.subr.mxu0 0.0
          %453 = vmatpush2.msra.mxu0 0.0
          %454 = vmatprep.subr.mxu0 0.0
          %455 = vmatpush2.msra.mxu0 0.0
          %456 = vmatprep.subr.mxu0 0.0
          %457 = vmatpush2.msra.mxu0 0.0
          %458 = vmatprep.subr.mxu0 0.0
          %459 = vmatpush2.msra.mxu0 0.0
          %460 = vmatprep.subr.mxu0 0.0
          %461 = vmatpush2.msra.mxu0 0.0
          %462 = vmatprep.subr.mxu0 0.0
          %463 = vmatpush2.msra.mxu0 0.0
          %464 = vmatprep.subr.mxu0 0.0
          %465 = vmatpush2.msra.mxu0 0.0
          %466 = vmatprep.subr.mxu0 0.0
          %467 = vmatpush2.msra.mxu0 0.0
          %468 = vmatprep.subr.mxu0 0.0
          %469 = vmatpush2.msra.mxu0 0.0
          %470 = vmatprep.subr.mxu0 0.0
          %471 = vmatpush2.msra.mxu0 0.0
          %472 = vmatprep.subr.mxu0 0.0
          %473 = vmatpush2.msra.mxu0 0.0
          %474 = vmatprep.subr.mxu0 0.0
          %475 = vmatpush2.msra.mxu0 0.0
          %476 = vmatprep.subr.mxu0 0.0
          %477 = vmatpush2.msra.mxu0 0.0
          %478 = vmatprep.subr.mxu0 0.0
          %479 = vmatpush2.msra.mxu0 0.0
          %480 = vmatprep.subr.mxu0 0.0
          %481 = vmatpush2.msra.mxu0 0.0
          %482 = vmatprep.subr.mxu0 0.0
          %483 = vmatpush2.msra.mxu0 0.0
          %484 = vmatprep.mubr.f32.mxu0 0.0
          %485 = vmatmul.mubr.f32.gmra.mxu0 %v418
          %v486 = vpop.f32.mrf.mxu0
          %v487 = vadd.f32 0.0, %v486
          %v488 = vpop.f32.mrf.mxu0
          %489 = vdwg.mxu0
          %v490 = vadd.f32 %v415, %v487
          %491 = vst.msk [vmem:[#allocation4] sm:$0xff] %vm307, %v490
          %492 = vst.msk [vmem:[#allocation2] sm:$0xff] %vm407, %v389
        $region52: #{tpu_custom_call.1} parent=31 // pred_fallthru
          _
        %p493 = scmp.le.s32.totalorder %s288, %s289
        %p494 = scmp.gt.s32.totalorder %s290, %s287
        %p495 = pnand %p493, %p494
        %p496 = pneg %p495
        // Predicated region
        $region53: #{tpu_custom_call.1} parent=31 // pred_check
          _
        $region54: #{tpu_custom_call.1} parent=31 // pred_check_branch
          %498 = sbr.rel (%p495) target = $region56
        $region55: #{tpu_custom_call.1} parent=31 // pred_region
          %v499 = vld [vmem:[%s236] sm:$0xff]
          %v500 = vmul.f32 %v499, 0.17677669
          %v501 = vld [vmem:[%s245] sm:$0xff]
          %vm502 = vcmask 261120
          %v504 = vsel %vm502, %v500, 0
          %v507 = vsel %vm502, %v501, 0
          %509 = vmatprep.subr.mxu0 0.0
          %510 = vmatpush1.xpose.msra.mxu0 0.0
          %511 = vmatprep.subr.mxu0 0.0
          %512 = vmatpush1.xpose.msra.mxu0 0.0
          %513 = vmatprep.subr.mxu0 0.0
          %514 = vmatpush1.xpose.msra.mxu0 0.0
          %515 = vmatprep.subr.mxu0 0.0
          %516 = vmatpush1.xpose.msra.mxu0 0.0
          %517 = vmatprep.subr.mxu0 0.0
          %518 = vmatpush1.xpose.msra.mxu0 0.0
          %519 = vmatprep.subr.mxu0 0.0
          %520 = vmatpush1.xpose.msra.mxu0 0.0
          %521 = vmatprep.subr.mxu0 0.0
          %522 = vmatpush1.xpose.msra.mxu0 0.0
          %523 = vmatprep.subr.mxu0 0.0
          %524 = vmatpush1.xpose.msra.mxu0 0.0
          %525 = vmatprep.subr.mxu0 0.0
          %526 = vmatpush1.xpose.msra.mxu0 0.0
          %527 = vmatprep.subr.mxu0 0.0
          %528 = vmatpush1.xpose.msra.mxu0 0.0
          %529 = vmatprep.subr.mxu0 0.0
          %530 = vmatpush1.xpose.msra.mxu0 0.0
          %531 = vmatprep.subr.mxu0 0.0
          %532 = vmatpush1.xpose.msra.mxu0 0.0
          %533 = vmatprep.subr.mxu0 0.0
          %534 = vmatpush1.xpose.msra.mxu0 0.0
          %535 = vmatprep.subr.mxu0 0.0
          %536 = vmatpush1.xpose.msra.mxu0 0.0
          %537 = vmatprep.subr.mxu0 0.0
          %538 = vmatpush1.xpose.msra.mxu0 0.0
          %539 = vmatprep.subr.mxu0 0.0
          %540 = vmatpush1.xpose.msra.mxu0 %v507
          %541 = vmatprep.subr.mxu0 0.0
          %542 = vmatpush2.xpose.msra.mxu0 0.0
          %543 = vmatprep.subr.mxu0 0.0
          %544 = vmatpush2.xpose.msra.mxu0 0.0
          %545 = vmatprep.subr.mxu0 0.0
          %546 = vmatpush2.xpose.msra.mxu0 0.0
          %547 = vmatprep.subr.mxu0 0.0
          %548 = vmatpush2.xpose.msra.mxu0 0.0
          %549 = vmatprep.subr.mxu0 0.0
          %550 = vmatpush2.xpose.msra.mxu0 0.0
          %551 = vmatprep.subr.mxu0 0.0
          %552 = vmatpush2.xpose.msra.mxu0 0.0
          %553 = vmatprep.subr.mxu0 0.0
          %554 = vmatpush2.xpose.msra.mxu0 0.0
          %555 = vmatprep.subr.mxu0 0.0
          %556 = vmatpush2.xpose.msra.mxu0 0.0
          %557 = vmatprep.subr.mxu0 0.0
          %558 = vmatpush2.xpose.msra.mxu0 0.0
          %559 = vmatprep.subr.mxu0 0.0
          %560 = vmatpush2.xpose.msra.mxu0 0.0
          %561 = vmatprep.subr.mxu0 0.0
          %562 = vmatpush2.xpose.msra.mxu0 0.0
          %563 = vmatprep.subr.mxu0 0.0
          %564 = vmatpush2.xpose.msra.mxu0 0.0
          %565 = vmatprep.subr.mxu0 0.0
          %566 = vmatpush2.xpose.msra.mxu0 0.0
          %567 = vmatprep.subr.mxu0 0.0
          %568 = vmatpush2.xpose.msra.mxu0 0.0
          %569 = vmatprep.subr.mxu0 0.0
          %570 = vmatpush2.xpose.msra.mxu0 0.0
          %571 = vmatprep.subr.mxu0 0.0
          %572 = vmatpush2.xpose.msra.mxu0 0.0
          %573 = vmatprep.mubr.f32.mxu0 0.0
          %574 = vmatmul.mubr.f32.gmra.mxu0 %v504
          %v575 = vpop.f32.mrf.mxu0
          %v576 = vadd.f32 0.0, %v575
          %v577 = vpop.f32.mrf.mxu0
          %578 = vdwg.mxu0
          %v579 = vlaneseq
          %v580 = vshrl.u32 %v579, 7
          %v581 = vstv %s287
          %v582 = vadd.s32 %v580, %v581
          %v583 = vlaneseq
          %v584 = vand.u32 %v583, 127
          %v585 = vstv %s288
          %v586 = vadd.s32 %v584, %v585
          %vm587 = vcmp.gt.s32.totalorder %v586, %v582
          %v588 = vsel %vm587, -10000.0, %v576
          %v589 = vld [vmem:[#allocation2] sm:$0xff]
          %vm590 = vcmask 64512
          %v591 = vsel %vm590, %v588, -inf
          %592 = vmax.xlane.f32.xlu0 %v591
          %v593 = vpop.xlane.xlu0 %592
          %v594 = vmax.f32 %v589, %v593
          %v595 = vsub.f32 %v589, %v594
          %v596 = vmul.f32 %v595, 1.442695
          %v597 = vpow.pop %v596
          %599 = vset.pattern.permute.xlu0 0
          %600 = vperm.xlu0 %599, %v594
          %v601 = vpop.permute.xlu0 %600
          %v603 = vsub.f32 %v588, %v601
          %v604 = vmul.f32 %v603, 1.442695
          %v605 = vpow.pop %v604
          %v606 = vld [vmem:[#allocation3] sm:$0xff]
          %v607 = vmul.f32 %v597, %v606
          %v608 = vsel %vm590, %v605, 0.0
          %609 = vadd.xlane.f32.xlu0 %v608
          %v610 = vpop.xlane.xlu0 %609
          %v611 = vadd.f32 %v607, %v610
          %vm612 = vcmask 7168
          %613 = vst.msk [vmem:[#allocation3] sm:$0xff] %vm612, %v611
          %v614 = vld [vmem:[#allocation4] sm:$0xff]
          %616 = vset.pattern.permute.xlu0 0
          %617 = vperm.xlu0 %616, %v597
          %v618 = vpop.permute.xlu0 %617
          %v620 = vmul.f32 %v618, %v614
          %v621 = vld [vmem:[%s254] sm:$0xff]
          %v623 = vsel %vm590, %v605, 0
          %625 = vmatprep.subr.mxu0 0.0
          %626 = vmatpush1.msra.mxu0 0.0
          %627 = vmatprep.subr.mxu0 0.0
          %628 = vmatpush1.msra.mxu0 0.0
          %629 = vmatprep.subr.mxu0 0.0
          %630 = vmatpush1.msra.mxu0 0.0
          %631 = vmatprep.subr.mxu0 0.0
          %632 = vmatpush1.msra.mxu0 0.0
          %633 = vmatprep.subr.mxu0 0.0
          %634 = vmatpush1.msra.mxu0 0.0
          %635 = vmatprep.subr.mxu0 0.0
          %636 = vmatpush1.msra.mxu0 0.0
          %637 = vmatprep.subr.mxu0 0.0
          %638 = vmatpush1.msra.mxu0 0.0
          %639 = vmatprep.subr.mxu0 0.0
          %640 = vmatpush1.msra.mxu0 0.0
          %641 = vmatprep.subr.mxu0 0.0
          %642 = vmatpush1.msra.mxu0 0.0
          %643 = vmatprep.subr.mxu0 0.0
          %644 = vmatpush1.msra.mxu0 0.0
          %645 = vmatprep.subr.mxu0 0.0
          %646 = vmatpush1.msra.mxu0 0.0
          %647 = vmatprep.subr.mxu0 0.0
          %648 = vmatpush1.msra.mxu0 0.0
          %649 = vmatprep.subr.mxu0 0.0
          %650 = vmatpush1.msra.mxu0 0.0
          %651 = vmatprep.subr.mxu0 0.0
          %652 = vmatpush1.msra.mxu0 0.0
          %653 = vmatprep.subr.mxu0 0.0
          %654 = vmatpush1.msra.mxu0 0.0
          %655 = vmatprep.subr.mxu0 0.0
          %656 = vmatpush1.msra.mxu0 %v621
          %657 = vmatprep.subr.mxu0 0.0
          %658 = vmatpush2.msra.mxu0 0.0
          %659 = vmatprep.subr.mxu0 0.0
          %660 = vmatpush2.msra.mxu0 0.0
          %661 = vmatprep.subr.mxu0 0.0
          %662 = vmatpush2.msra.mxu0 0.0
          %663 = vmatprep.subr.mxu0 0.0
          %664 = vmatpush2.msra.mxu0 0.0
          %665 = vmatprep.subr.mxu0 0.0
          %666 = vmatpush2.msra.mxu0 0.0
          %667 = vmatprep.subr.mxu0 0.0
          %668 = vmatpush2.msra.mxu0 0.0
          %669 = vmatprep.subr.mxu0 0.0
          %670 = vmatpush2.msra.mxu0 0.0
          %671 = vmatprep.subr.mxu0 0.0
          %672 = vmatpush2.msra.mxu0 0.0
          %673 = vmatprep.subr.mxu0 0.0
          %674 = vmatpush2.msra.mxu0 0.0
          %675 = vmatprep.subr.mxu0 0.0
          %676 = vmatpush2.msra.mxu0 0.0
          %677 = vmatprep.subr.mxu0 0.0
          %678 = vmatpush2.msra.mxu0 0.0
          %679 = vmatprep.subr.mxu0 0.0
          %680 = vmatpush2.msra.mxu0 0.0
          %681 = vmatprep.subr.mxu0 0.0
          %682 = vmatpush2.msra.mxu0 0.0
          %683 = vmatprep.subr.mxu0 0.0
          %684 = vmatpush2.msra.mxu0 0.0
          %685 = vmatprep.subr.mxu0 0.0
          %686 = vmatpush2.msra.mxu0 0.0
          %687 = vmatprep.subr.mxu0 0.0
          %688 = vmatpush2.msra.mxu0 0.0
          %689 = vmatprep.mubr.f32.mxu0 0.0
          %690 = vmatmul.mubr.f32.gmra.mxu0 %v623
          %v691 = vpop.f32.mrf.mxu0
          %v692 = vadd.f32 0.0, %v691
          %v693 = vpop.f32.mrf.mxu0
          %694 = vdwg.mxu0
          %v695 = vadd.f32 %v620, %v692
          %696 = vst.msk [vmem:[#allocation4] sm:$0xff] %vm502, %v695
          %697 = vst.msk [vmem:[#allocation2] sm:$0xff] %vm612, %v594
        $region56: #{tpu_custom_call.1} parent=31 // pred_fallthru
          _
        // Predicated region
        $region57: #{tpu_custom_call.1} parent=31 // pred_check
          %p698 = pneg %p291
        $region58: #{tpu_custom_call.1} parent=31 // pred_check_branch
          %700 = sbr.rel (%p698) target = $region60
        $region59: #{tpu_custom_call.1} parent=31 // pred_region
          %v701 = vld [vmem:[#allocation3] sm:$0xff]
          %v702 = vrcp.pop %v701
          %v703 = vld [vmem:[#allocation4] sm:$0xff]
          %705 = vset.pattern.permute.xlu0 0
          %706 = vperm.xlu0 %705, %v702
          %v707 = vpop.permute.xlu0 %706
          %v709 = vmul.f32 %v703, %v707
          %vm710 = vcmask 261120
          %711 = vst.msk [vmem:[%s286] sm:$0xff] %vm710, %v709
        $region60: #{tpu_custom_call.1} parent=31 // pred_fallthru
          _
        %s712 = sand.u32 %s136, 1
        %s713 = scalar_lea.sflag [#allocation7], %s712
        %s714 = sand.u32 %s136, 1
        %s715 = smul.addr %s714, 8
        %s716 = scalar_lea.vmem [#allocation11], %s715
        // Predicated region
        $region61: #{tpu_custom_call.1} parent=31 // pred_check
          %p717 = pneg %p146
        $region62: #{tpu_custom_call.1} parent=31 // pred_check_branch
          %719 = sbr.rel (%p717) target = $region64
        $region63: #{tpu_custom_call.1} parent=31 // pred_region
          %s721 = ssub.s32 128, 128
          %722 = vsyncadd %s713, %s721
          %s723 = sadd.s32 %s29, %s28
          %s724 = smul.addr %s723, 128
          %s725 = scalar_lea.hbm %s3, %s724
          %s727 = sshll.u32 %s716, 4
          %s728 = int_to_ptr.vmem [resolvable:$true] %s727
          %730 = dma.vmem_to_hbm [thread:$0]  %s728, 128, %s725, %s713
        $region64: #{tpu_custom_call.1} parent=31 // pred_fallthru
          _
      $region32: #{tpu_custom_call.1} parent=5 // pred_fallthru
        _
      %p731 = scmp.le.s32.totalorder 2, %s18
      // Predicated region
      $region65: #{tpu_custom_call.1} parent=5 // pred_check
        %p732 = pneg %p731
      $region66: #{tpu_custom_call.1} parent=5 // pred_check_branch
        %734 = sbr.rel (%p732) target = $region68
      $region67: #{tpu_custom_call.1} parent=5 // pred_region
        %s735 = ssub.s32 %s18, 2
        // Predicated region
        $region69: #{tpu_custom_call.1} parent=67 // pred_check
          %p736 = pneg %p152
        $region70: #{tpu_custom_call.1} parent=67 // pred_check_branch
          %738 = sbr.rel (%p736) target = $region72
        $region71: #{tpu_custom_call.1} parent=67 // pred_region
          %s739 = sand.u32 %s137, 1
          %s740 = scalar_lea.sflag [#allocation7], %s739
          %s741 = sand.u32 %s137, 1
          %s742 = smul.addr %s741, 8
          %s743 = scalar_lea.vmem [#allocation11], %s742
          %744 = dma.done %s740, 128
        $region72: #{tpu_custom_call.1} parent=67 // pred_fallthru
          _
      $region68: #{tpu_custom_call.1} parent=5 // pred_fallthru
        _
    $region6: #{tpu_custom_call.1} parent=1 // loop_footer
      %s22 = sadd.s32 1, %s18
    $region7: #{tpu_custom_call.1} parent=1 // loop_footer_branch
      %17 = sbr.rel target = $region3
    $region8: #{tpu_custom_call.1} parent=1 // loop_exit
      _
    %745 = vsyncpa [#allocation6], 1
    %s746 = scalar_lea.sflag [#allocation6], 1
    %747 = vsyncpa %s746, 1
    %748 = vsyncpa [#allocation9], 1
    %s749 = scalar_lea.sflag [#allocation9], 1
    %750 = vsyncpa %s749, 1
    %751 = vsyncpa [#allocation7], 1
    %s752 = scalar_lea.sflag [#allocation7], 1
    %753 = vsyncpa %s752, 1

</llo_original>
